<compile_context>
chip_gen: v7x
topology: tpu7x:2x2x1
jax: 0.10.0
libtpu: 0.0.40
codegen_flags: <defaults>
</compile_context>

<pallas_src>
import functools

import jax
import jax.numpy as jnp
from jax.experimental import pallas as pl
from jax.experimental.pallas import tpu as pltpu


# ----------------------------------------------------------------------------
# helpers
# ----------------------------------------------------------------------------
def _round_up(n, m):
    return (n + m - 1) // m * m


def _divisors(n):
    return [d for d in range(1, n + 1) if n % d == 0]


def _largest_divisor(n, *, multiple_of=1, cap=None, fits=None):
    """Largest divisor of n that is a multiple of `multiple_of`, <= cap, passes `fits`."""
    cap = n if cap is None else min(n, cap)
    best = 0
    for d in _divisors(n):
        if d > cap or d % multiple_of:
            continue
        if fits is not None and not fits(d):
            continue
        best = d
    return best


def _tpu_vmem_bytes():
    """Physical per-core VMEM; conservative default if the query is unavailable."""
    try:
        info = pltpu.get_tpu_info()
        v = getattr(info, "vmem_capacity_bytes", None)
        if v:
            return int(v)
    except Exception:
        pass
    return 64 * 1024 * 1024  # v7x per-core physical VMEM (smallest of v5e/v6e/v7x)


# ----------------------------------------------------------------------------
# Kernel 1: hoisted input projection  gates_x = X @ W_ih + b  -> bf16 output.
# ----------------------------------------------------------------------------
def matmul_bias_kernel(x_ref, w_ref, b_ref, o_ref):
    acc = jnp.dot(x_ref[...], w_ref[...], preferred_element_type=jnp.float32)
    o_ref[...] = (acc + b_ref[...]).astype(o_ref.dtype)


# ----------------------------------------------------------------------------
# Kernel 2: LSTM recurrence.
#   gx_ref : (Tb, Bb, 4Hp) bf16  precomputed x@W_ih + bias for this block
#   whh_ref: (Hp, 4Hp)     bf16  recurrent weights (grid-invariant, VMEM-resident)
#   h_ref  : (Tb, Bb, Hp)  bf16  hidden-state output (time-major)
#   h_scr/c_scr: (Bb, Hp)  f32   carries across time blocks of one batch block
# ----------------------------------------------------------------------------
def lstm_kernel(gx_ref, whh_ref, h_ref, h_scr, c_scr, *, hidden, tb):
    @pl.when(pl.program_id(1) == 0)          # first time block of this batch block
    def _():
        h_scr[...] = jnp.zeros_like(h_scr)
        c_scr[...] = jnp.zeros_like(c_scr)

    w_hh = whh_ref[...]
    H = hidden

    def step(j, h, c):
        gates = gx_ref[j].astype(jnp.float32) + jnp.dot(
            h.astype(jnp.bfloat16), w_hh, preferred_element_type=jnp.float32)
        # PyTorch gate order: input, forget, cell(g), output (128-aligned slices).
        i_g = jax.nn.sigmoid(gates[:, 0 * H:1 * H])
        f_g = jax.nn.sigmoid(gates[:, 1 * H:2 * H])
        g_g = jnp.tanh(gates[:, 2 * H:3 * H])
        o_g = jax.nn.sigmoid(gates[:, 3 * H:4 * H])
        c = f_g * c + i_g * g_g
        h = o_g * jnp.tanh(c)
        h_ref[j] = h.astype(h_ref.dtype)     # dense (Bb, Hp) store per step
        return h, c

    h = h_scr[...]
    c = c_scr[...]
    if tb <= 8:                              # short block: full static unroll
        for j in range(tb):
            h, c = step(j, h, c)
    else:                                    # long block: bounded-unroll loop
        h, c = jax.lax.fori_loop(0, tb, lambda j, hc: step(j, *hc), (h, c),
                                 unroll=4)

    h_scr[...] = h
    c_scr[...] = c


# ----------------------------------------------------------------------------
# Kernel 3: vocab projection, batch-major output with one dense store per block.
#   h_ref: (tt, Bp, Hp) bf16 time-major;  o_ref: (Bp, tt, tv) f32 batch-major.
# ----------------------------------------------------------------------------
def fc_kernel(h_ref, w_ref, b_ref, o_ref, *, tb, batch, hidden):
    # Apply the (t, b) -> (b, t) swap to the narrow Hp-wide activation (XLU work,
    # essentially free here), NOT to the Vp-wide logits, and write the output
    # block with a single unmasked store.
    h_bt = jnp.transpose(h_ref[...].astype(jnp.float32), (1, 0, 2))   # (Bp, tt, Hp)
    h_bt = h_bt.astype(jnp.bfloat16).reshape(batch * tb, hidden)
    y = (jnp.dot(h_bt, w_ref[...], preferred_element_type=jnp.float32)
         + b_ref[...])                                                # (Bp*tt, tv)
    o_ref[...] = y.reshape(batch, tb, y.shape[-1])


# ----------------------------------------------------------------------------
# Parameter packing: gate-block-aware padding + transpose + bf16 storage.
# ----------------------------------------------------------------------------
def _pack_params(params, E, H, V, Ep, Hp, Vp):
    f32, bf16 = jnp.float32, jnp.bfloat16

    def pad_gate_mat(w, c, cp):
        # w: (4H, c) torch layout [i|f|g|o] row blocks -> transposed (cp, 4Hp) bf16
        w4 = w.reshape(4, H, c)
        w4 = jnp.pad(w4, ((0, 0), (0, Hp - H), (0, cp - c)))
        return jnp.transpose(w4.reshape(4 * Hp, cp)).astype(bf16)

    w_ih = pad_gate_mat(params["weight_ih"], E, Ep)            # (Ep, 4Hp) bf16
    w_hh = pad_gate_mat(params["weight_hh"], H, Hp)            # (Hp, 4Hp) bf16
    b = (params["bias_ih"] + params["bias_hh"]).reshape(4, H)
    b = jnp.pad(b, ((0, 0), (0, Hp - H))).reshape(1, 4 * Hp).astype(f32)
    w_fc = jnp.pad(params["fc_w"],
                   ((0, Vp - V), (0, Hp - H))).T.astype(bf16)  # (Hp, Vp) bf16
    b_fc = jnp.pad(params["fc_b"], (0, Vp - V)).reshape(1, Vp).astype(f32)
    return w_ih, w_hh, b, w_fc, b_fc


# ----------------------------------------------------------------------------
# Forward pass wrapper.
# ----------------------------------------------------------------------------
def decoder_forward(features, captions, params):
    f32, bf16 = jnp.float32, jnp.bfloat16
    V, E = params["embed"].shape
    H = params["weight_hh"].shape[1]
    B = features.shape[0]
    T = captions.shape[1]              # LSTM sequence length = (cap_len-1) + 1

    Bp = _round_up(B, 8)               # sublane alignment
    Ep = _round_up(E, 128)             # lane alignment
    Hp = _round_up(H, 128)
    Vp = _round_up(V, 128)
    G = 4 * Hp                         # padded gate width

    # Generation-aware VMEM budget (v5e/v6e: 128 MiB phys, v7x: 64 MiB phys).
    phys = _tpu_vmem_bytes()
    vmem_limit = min(phys * 3 // 4, 96 * 1024 * 1024)   # 48 MiB v7x, 96 MiB v5e/v6e
    budget = vmem_limit // 2                             # target for resident tiles
    big = phys >= 100 * 1024 * 1024
    cap_lane = 1024 if big else 512                      # tn / tv caps
    cap_tm = 512 if big else 256

    # ---- glue: embedding gather + concat, built time-major in bf16 (one pass).
    # TODO(synk): the data-dependent embedding row gather stays in XLA; fusing it
    # into kernel 1 via scalar-prefetched token ids is a possible further step.
    cap_t = captions[:, :-1].T                                   # (T-1, B)
    emb = jnp.take(params["embed"].astype(bf16), cap_t, axis=0)  # (T-1, B, E) bf16
    x = jnp.concatenate([features.astype(bf16)[None], emb], 0)   # (T, B, E) bf16
    x = jnp.pad(x, ((0, 0), (0, Bp - B), (0, Ep - E)))
    x2d = x.reshape(T * Bp, Ep)                                  # rows = (t, b)

    w_ih, w_hh, b_g, w_fc, b_fc = _pack_params(params, E, H, V, Ep, Hp, Vp)

    # ---- kernel 1: gates_x = X @ W_ih + b  (parallel, big-M MXU matmul, bf16 out)
    M = T * Bp
    tn = _largest_divisor(G, multiple_of=128, cap=cap_lane,
                          fits=lambda d: 2 * Ep * d * 2 <= budget // 2) or 128

    def k1_fits(tm_):
        return 2 * (tm_ * Ep * 2 + Ep * tn * 2 + tm_ * tn * 2 + tn * 4) <= budget

    tm = 0
    for pref in (256, 128, 16, 8):      # prefer MXU-aligned M tiles
        tm = _largest_divisor(M, multiple_of=pref, cap=cap_tm, fits=k1_fits)
        if tm:
            break
    tm = tm or 8

    gates_x = pl.pallas_call(
        matmul_bias_kernel,
        out_shape=jax.ShapeDtypeStruct((M, G), bf16),
        grid_spec=pltpu.PrefetchScalarGridSpec(
            num_scalar_prefetch=0,
            grid=(M // tm, G // tn),
            in_specs=[pl.BlockSpec((tm, Ep), lambda i, j: (i, 0)),
                      pl.BlockSpec((Ep, tn), lambda i, j: (0, j)),
                      pl.BlockSpec((1, tn), lambda i, j: (0, j))],
            out_specs=pl.BlockSpec((tm, tn), lambda i, j: (i, j)),
        ),
        compiler_params=pltpu.CompilerParams(
            dimension_semantics=("parallel", "parallel"),
            vmem_limit_bytes=vmem_limit),
    )(x2d, w_ih, b_g)
    gates_x = gates_x.reshape(T, Bp, G)          # free: rows already ordered (t, b)

    # ---- kernel 2: LSTM recurrence; batch blocks parallel, time blocks serial.
    Bb = Bp // 2 if Bp % 16 == 0 else Bp         # 2 batch blocks when possible (v7x)

    def lstm_fits(tb_):
        return (2 * (tb_ * Bb * G * 2 + tb_ * Bb * Hp * 2 + Hp * G * 2)
                + 2 * Bb * Hp * 4) <= budget

    Tb = _largest_divisor(T, cap=32, fits=lstm_fits) or 1

    lstm = functools.partial(lstm_kernel, hidden=Hp, tb=Tb)
    h_seq = pl.pallas_call(
        lstm,
        out_shape=jax.ShapeDtypeStruct((T, Bp, Hp), bf16),
        grid_spec=pltpu.PrefetchScalarGridSpec(
            num_scalar_prefetch=0,
            grid=(Bp // Bb, T // Tb),
            in_specs=[pl.BlockSpec((Tb, Bb, G), lambda b, t: (t, b, 0)),
                      pl.BlockSpec((Hp, G), lambda b, t: (0, 0))],
            out_specs=pl.BlockSpec((Tb, Bb, Hp), lambda b, t: (t, b, 0)),
            scratch_shapes=[pltpu.VMEM((Bb, Hp), f32),       # h carry
                            pltpu.VMEM((Bb, Hp), f32)],      # c carry
        ),
        compiler_params=pltpu.CompilerParams(
            dimension_semantics=("parallel", "arbitrary"),   # recurrence is serial
            vmem_limit_bytes=vmem_limit),
    )(gates_x, w_hh)

    # ---- kernel 3: logits = H @ W_fc + b_fc, batch-major output, W_fc read once.
    tv = _largest_divisor(Vp, multiple_of=128, cap=cap_lane,
                          fits=lambda d: 2 * Hp * d * 2 <= budget // 2) or 128

    def fc_fits(tt_):
        return 2 * (tt_ * Bp * Hp * 2 + Bp * tt_ * tv * 4
                    + Hp * tv * 2 + tv * 4) <= budget

    # tt must be a divisor of T and (multiple of 8 or == T) for an aligned output
    # block; T//tt == 1 whenever the whole h block fits the VMEM budget.
    tt_cands = [d for d in _divisors(T) if (d == T or d % 8 == 0) and fc_fits(d)]
    tt = max(tt_cands) if tt_cands else T

    fc = functools.partial(fc_kernel, tb=tt, batch=Bp, hidden=Hp)
    logits = pl.pallas_call(
        fc,
        out_shape=jax.ShapeDtypeStruct((Bp, T, Vp), f32),
        grid_spec=pltpu.PrefetchScalarGridSpec(
            num_scalar_prefetch=0,
            grid=(Vp // tv, T // tt),          # vocab OUTER: W_fc streamed once
            in_specs=[pl.BlockSpec((tt, Bp, Hp), lambda j, i: (i, 0, 0)),
                      pl.BlockSpec((Hp, tv), lambda j, i: (0, j)),
                      pl.BlockSpec((1, tv), lambda j, i: (0, j))],
            out_specs=pl.BlockSpec((Bp, tt, tv), lambda j, i: (0, i, j)),
        ),
        compiler_params=pltpu.CompilerParams(
            dimension_semantics=("parallel", "parallel"),
            vmem_limit_bytes=vmem_limit),
    )(h_seq, w_fc, b_fc)

    # Slice keeps the module's (B, T, V) contract; callers that can consume the
    # padded (Bp, T, Vp) buffer directly should do so to skip this HBM copy.
    return logits[:B, :, :V]


# ----------------------------------------------------------------------------
# Pure-JAX reference (emulates the kernels' bf16 storage for a tight check).
# ----------------------------------------------------------------------------
def decoder_forward_ref(features, captions, params):
    f32 = jnp.float32

    def q(a):  # emulate bf16 storage / streaming used by the kernels
        return a.astype(jnp.bfloat16).astype(f32)

    H = params["weight_hh"].shape[1]
    w_ih = q(params["weight_ih"]).T             # (E, 4H)
    w_hh = q(params["weight_hh"]).T             # (H, 4H)
    b = (params["bias_ih"] + params["bias_hh"]).astype(f32)
    w_fc = q(params["fc_w"]).T                  # (H, V)
    b_fc = params["fc_b"].astype(f32)

    cap = captions[:, :-1]
    emb = jnp.take(params["embed"], cap, axis=0)
    x = jnp.concatenate([features[:, None, :], emb], axis=1).astype(f32)  # (B,T,E)
    gates_x = q(q(x) @ w_ih + b)                # bf16-stored gates, as in kernel 1
    B = x.shape[0]

    def step(carry, gx_t):
        h, c = carry
        gates = gx_t + q(h) @ w_hh
        i_g = jax.nn.sigmoid(gates[:, 0 * H:1 * H])
        f_g = jax.nn.sigmoid(gates[:, 1 * H:2 * H])
        g_g = jnp.tanh(gates[:, 2 * H:3 * H])
        o_g = jax.nn.sigmoid(gates[:, 3 * H:4 * H])
        c_n = f_g * c + i_g * g_g
        h_n = o_g * jnp.tanh(c_n)
        return (h_n, c_n), h_n

    h0 = jnp.zeros((B, H), f32)
    c0 = jnp.zeros((B, H), f32)
    _, hs = jax.lax.scan(step, (h0, c0), jnp.transpose(gates_x, (1, 0, 2)))
    hs = jnp.transpose(hs, (1, 0, 2))                                     # (B,T,H)
    return q(hs) @ w_fc + b_fc


# ----------------------------------------------------------------------------
# Parameter init (torch-convention shapes, mirrors the PyTorch module).
# ----------------------------------------------------------------------------
def init_params(key, embed_size, hidden_size, vocab_size):
    ks = jax.random.split(key, 6)
    H = hidden_size
    bound = 1.0 / (H ** 0.5)
    return {
        "embed": jax.random.normal(ks[0], (vocab_size, embed_size), jnp.float32),
        "weight_ih": jax.random.uniform(ks[1], (4 * H, embed_size), jnp.float32,
                                        -bound, bound),
        "weight_hh": jax.random.uniform(ks[2], (4 * H, H), jnp.float32,
                                        -bound, bound),
        "bias_ih": jax.random.uniform(ks[3], (4 * H,), jnp.float32, -bound, bound),
        "bias_hh": jax.random.uniform(ks[4], (4 * H,), jnp.float32, -bound, bound),
        "fc_w": jax.random.uniform(ks[5], (vocab_size, H), jnp.float32, -1.0, 1.0),
        "fc_b": jnp.zeros((vocab_size,), jnp.float32),   # fc.bias = 0
    }


if __name__ == "__main__":
    embed_size, hidden_size, vocab_size = 32, 32, 64
    batch, cap_len = 2, 8          # LSTM sequence length = (cap_len-1) + 1 = 8

    key = jax.random.PRNGKey(0)
    k_p, k_f, k_c = jax.random.split(key, 3)
    params = init_params(k_p, embed_size, hidden_size, vocab_size)
    features = jax.random.normal(k_f, (batch, embed_size), jnp.float32)
    captions = jax.random.randint(k_c, (batch, cap_len), 0, vocab_size,
                                  dtype=jnp.int32)

    out = decoder_forward(features, captions, params)
    out = jax.block_until_ready(out)

    ref = decoder_forward_ref(features, captions, params)
    assert out.shape == (batch, cap_len, vocab_size)
    err = float(jnp.max(jnp.abs(out - ref)))
    # bf16 storage of weights/activations/gates is deliberate; tolerance reflects it.
    assert jnp.allclose(out, ref, rtol=2e-2, atol=2e-2), f"mismatch vs ref: {err}"

    print("KERNEL_OK")
</pallas_src>

<mosaic_0001>
module attributes {stable_mosaic.version = 11 : i64} {
  func.func @matmul_bias_kernel(%arg0: i32, %arg1: i32, %arg2: memref<64x128xbf16, #tpu.memory_space<vmem>>, %arg3: memref<128x512xbf16, #tpu.memory_space<vmem>>, %arg4: memref<1x512xf32, #tpu.memory_space<vmem>>, %arg5: memref<64x512xbf16, #tpu.memory_space<vmem>>) attributes {dimension_semantics = [#tpu.dimension_semantics<parallel>, #tpu.dimension_semantics<parallel>], iteration_bounds = array<i64: 1, 1>, scalar_prefetch = 0 : i64, scratch_operands = 0 : i64, tpu.core_type = #tpu.core_type<tc>, window_params = [{transform_indices = @transform_0, window_bounds = array<i64: 64, 128>}, {transform_indices = @transform_1, window_bounds = array<i64: 128, 512>}, {transform_indices = @transform_2, window_bounds = array<i64: 1, 512>}, {transform_indices = @transform_3, window_bounds = array<i64: 64, 512>}]} {
    %c0 = arith.constant 0 : index
    %c0_0 = arith.constant 0 : index
    %0 = vector.load %arg2[%c0, %c0_0] : memref<64x128xbf16, #tpu.memory_space<vmem>>, vector<64x128xbf16>
    %c0_1 = arith.constant 0 : index
    %c0_2 = arith.constant 0 : index
    %1 = vector.load %arg3[%c0_1, %c0_2] : memref<128x512xbf16, #tpu.memory_space<vmem>>, vector<128x512xbf16>
    %cst = arith.constant dense<0.000000e+00> : vector<64x512xf32>
    %2 = tpu.matmul %0, %1, %cst {dimension_numbers = #tpu.dot_dimension_numbers<[1], [0], [0], [1], [0, 0, 1, 1], [], []>} : vector<64x128xbf16>, vector<128x512xbf16>, vector<64x512xf32> -> vector<64x512xf32>
    %c0_3 = arith.constant 0 : index
    %c0_4 = arith.constant 0 : index
    %3 = vector.load %arg4[%c0_3, %c0_4] : memref<1x512xf32, #tpu.memory_space<vmem>>, vector<1x512xf32>
    %4 = vector.broadcast %3 : vector<1x512xf32> to vector<64x512xf32>
    %5 = arith.addf %2, %4 : vector<64x512xf32>
    %6 = arith.truncf %5 : vector<64x512xf32> to vector<64x512xbf16>
    %c0_5 = arith.constant 0 : index
    %c0_6 = arith.constant 0 : index
    %7 = vector.load %arg5[%c0_5, %c0_6] : memref<64x512xbf16, #tpu.memory_space<vmem>>, vector<64x512xbf16>
    tpu.vector_store %arg5[%c0_5, %c0_6], %6 {strides = array<i32>} : memref<64x512xbf16, #tpu.memory_space<vmem>>, vector<64x512xbf16>,
    return
  }
  func.func @transform_0(%arg0: i32, %arg1: i32) -> (i32, i32) {
    %c0_i32 = arith.constant 0 : i32
    %c0_i32_0 = arith.constant 0 : i32
    return %arg0, %c0_i32 : i32, i32
  }
  func.func @transform_1(%arg0: i32, %arg1: i32) -> (i32, i32) {
    %c0_i32 = arith.constant 0 : i32
    %c0_i32_0 = arith.constant 0 : i32
    return %c0_i32, %arg1 : i32, i32
  }
  func.func @transform_2(%arg0: i32, %arg1: i32) -> (i32, i32) {
    %c0_i32 = arith.constant 0 : i32
    %c0_i32_0 = arith.constant 0 : i32
    return %c0_i32, %arg1 : i32, i32
  }
  func.func @transform_3(%arg0: i32, %arg1: i32) -> (i32, i32) {
    %c0_i32 = arith.constant 0 : i32
    return %arg0, %arg1 : i32, i32
  }
}

</mosaic_0001>

<llo_original>
// kernel: tpu_custom_call.1
$region0: #{tpu_custom_call.1}
  #allocation0 [shape = 'u32[]', space=smem, size = 0x4, offset = 0x4, fixed_abs, tag = 'smem constant byte address 0x4 - core index']
  #allocation1 [shape = 'u32[144,128]{1,0:T(1,128)}', space=vmem, size = 0x12000, scoped, tag = 'internal scratch']
  %s0 = inlined_call_operand.hbm [shape: bf16[64,128], index: 0, kind: input, shape index: {}]
  %s1 = inlined_call_operand.hbm [shape: bf16[128,512], index: 1, kind: input, shape index: {}]
  %s2 = inlined_call_operand.vmem [shape: f32[1,512], index: 2, kind: input, shape index: {}]
  %s3 = inlined_call_operand.hbm [shape: bf16[64,512], index: 3, kind: output, shape index: {}]
  %s4 = sld [smem:[#allocation0]]
  $region30: #{tpu_custom_call.1} parent=0
    _
  %s6 = ssub.s32 1, %s4
  %s7 = scalar_select 0, %s6, %s4
  $region1: #{tpu_custom_call.1} parent=0
    #allocation2 [shape = 'u8[16384]{0}', space=vmem, size = 0x4000, scoped, tag = 'input window, operand 0, single buffered']
    #allocation3 [shape = 's32[1]{0}', space=sflag, size = 0x4, scoped, tag = 'scoped memory for tpu_custom_call.1']
    #allocation4 [shape = 's32[1]{0}', space=sflag, size = 0x4, scoped, tag = 'scoped memory for tpu_custom_call.1']
    #allocation5 [shape = 'u8[131072]{0}', space=vmem, size = 0x20000, scoped, tag = 'input window, operand 1, single buffered']
    #allocation6 [shape = 's32[1]{0}', space=sflag, size = 0x4, scoped, tag = 'scoped memory for tpu_custom_call.1']
    #allocation7 [shape = 'u8[65536]{0}', space=vmem, size = 0x10000, scoped, tag = 'output window, operand 0, single buffered']
    %8 = vsyncpa [#allocation3], 0
    %9 = vsyncpa [#allocation6], 0
    %10 = vsyncpa [#allocation4], 0
    // Predicated region
    $region2: #{tpu_custom_call.1} parent=1 // pred_check
      _
    $region3: #{tpu_custom_call.1} parent=1 // pred_check_branch
      %12 = sbr.rel (0) target = $region5
    $region4: #{tpu_custom_call.1} parent=1 // pred_region
      %s14 = ssub.s32 512, 512
      %15 = vsyncadd [#allocation3], %s14
      %s16 = sshll.u32 [#allocation2], 4
      %s17 = int_to_ptr.vmem [resolvable:$true] %s16
      %22 = dma.hbm_to_vmem [thread:$0]  %s0, 512, %s17, [#allocation3], 64, 64, 4
    $region5: #{tpu_custom_call.1} parent=1 // pred_fallthru
      _
    // Predicated region
    $region6: #{tpu_custom_call.1} parent=1 // pred_check
      _
    $region7: #{tpu_custom_call.1} parent=1 // pred_check_branch
      %24 = sbr.rel (0) target = $region9
    $region8: #{tpu_custom_call.1} parent=1 // pred_region
      %s26 = ssub.s32 4096, 4096
      %27 = vsyncadd [#allocation6], %s26
      %s28 = sshll.u32 [#allocation5], 4
      %s29 = int_to_ptr.vmem [resolvable:$true] %s28
      %34 = dma.hbm_to_vmem [thread:$0]  %s1, 4096, %s29, [#allocation6], 256, 256, 16
    $region9: #{tpu_custom_call.1} parent=1 // pred_fallthru
      _
    // Predicated region
    $region10: #{tpu_custom_call.1} parent=1 // pred_check
      _
    $region11: #{tpu_custom_call.1} parent=1 // pred_check_branch
      %36 = sbr.rel (0) target = $region13
    $region12: #{tpu_custom_call.1} parent=1 // pred_region
      _
    $region13: #{tpu_custom_call.1} parent=1 // pred_fallthru
      _
    // Predicated region
    $region14: #{tpu_custom_call.1} parent=1 // pred_check
      _
    $region15: #{tpu_custom_call.1} parent=1 // pred_check_branch
      %38 = sbr.rel (0) target = $region17
    $region16: #{tpu_custom_call.1} parent=1 // pred_region
      %39 = dma.done [#allocation3], 512
    $region17: #{tpu_custom_call.1} parent=1 // pred_fallthru
      _
    // Predicated region
    $region18: #{tpu_custom_call.1} parent=1 // pred_check
      _
    $region19: #{tpu_custom_call.1} parent=1 // pred_check_branch
      %41 = sbr.rel (0) target = $region21
    $region20: #{tpu_custom_call.1} parent=1 // pred_region
      %42 = dma.done [#allocation6], 4096
    $region21: #{tpu_custom_call.1} parent=1 // pred_fallthru
      _
    %v44 = vld [vmem:[#allocation2] sm:$0xf]
    %v45 = vld [vmem:[#allocation2 + $0x4] sm:$0xf]
    %v46 = vld [vmem:[#allocation2 + $0x8] sm:$0xf]
    %v47 = vld [vmem:[#allocation2 + $0xc] sm:$0xf]
    %v48 = vld [vmem:[#allocation2 + $0x10] sm:$0xf]
    %v49 = vld [vmem:[#allocation2 + $0x14] sm:$0xf]
    %v50 = vld [vmem:[#allocation2 + $0x18] sm:$0xf]
    %v51 = vld [vmem:[#allocation2 + $0x1c] sm:$0xf]
    %v52 = vld [vmem:[#allocation5] sm:$0xff]
    %v53 = vld [vmem:[#allocation5 + $0x8] sm:$0xff]
    %v54 = vld [vmem:[#allocation5 + $0x10] sm:$0xff]
    %v55 = vld [vmem:[#allocation5 + $0x18] sm:$0xff]
    %v56 = vld [vmem:[#allocation5 + $0x20] sm:$0xff]
    %v57 = vld [vmem:[#allocation5 + $0x28] sm:$0xff]
    %v58 = vld [vmem:[#allocation5 + $0x30] sm:$0xff]
    %v59 = vld [vmem:[#allocation5 + $0x38] sm:$0xff]
    %v60 = vld [vmem:[#allocation5 + $0x40] sm:$0xff]
    %v61 = vld [vmem:[#allocation5 + $0x48] sm:$0xff]
    %v62 = vld [vmem:[#allocation5 + $0x50] sm:$0xff]
    %v63 = vld [vmem:[#allocation5 + $0x58] sm:$0xff]
    %v64 = vld [vmem:[#allocation5 + $0x60] sm:$0xff]
    %v65 = vld [vmem:[#allocation5 + $0x68] sm:$0xff]
    %v66 = vld [vmem:[#allocation5 + $0x70] sm:$0xff]
    %v67 = vld [vmem:[#allocation5 + $0x78] sm:$0xff]
    %v68 = vld [vmem:[#allocation5 + $0x80] sm:$0xff]
    %v69 = vld [vmem:[#allocation5 + $0x88] sm:$0xff]
    %v70 = vld [vmem:[#allocation5 + $0x90] sm:$0xff]
    %v71 = vld [vmem:[#allocation5 + $0x98] sm:$0xff]
    %v72 = vld [vmem:[#allocation5 + $0xa0] sm:$0xff]
    %v73 = vld [vmem:[#allocation5 + $0xa8] sm:$0xff]
    %v74 = vld [vmem:[#allocation5 + $0xb0] sm:$0xff]
    %v75 = vld [vmem:[#allocation5 + $0xb8] sm:$0xff]
    %v76 = vld [vmem:[#allocation5 + $0xc0] sm:$0xff]
    %v77 = vld [vmem:[#allocation5 + $0xc8] sm:$0xff]
    %v78 = vld [vmem:[#allocation5 + $0xd0] sm:$0xff]
    %v79 = vld [vmem:[#allocation5 + $0xd8] sm:$0xff]
    %v80 = vld [vmem:[#allocation5 + $0xe0] sm:$0xff]
    %v81 = vld [vmem:[#allocation5 + $0xe8] sm:$0xff]
    %v82 = vld [vmem:[#allocation5 + $0xf0] sm:$0xff]
    %v83 = vld [vmem:[#allocation5 + $0xf8] sm:$0xff]
    %v84 = vld [vmem:[%s2] sm:$0xf]
    %v86 = vlaneseq
    %v87 = vshrl.u32 %v86, 7
    %v88 = vsub.s32 0, %v87
    %v89 = vrot.slane %v84, %v88
    %v90 = vlaneseq
    %v91 = vshrl.u32 %v90, 7
    %v92 = vsub.s32 1, %v91
    %v93 = vrot.slane %v84, %v92
    %v94 = vlaneseq
    %v95 = vshrl.u32 %v94, 7
    %v96 = vsub.s32 2, %v95
    %v97 = vrot.slane %v84, %v96
    %v98 = vlaneseq
    %v99 = vshrl.u32 %v98, 7
    %v100 = vsub.s32 3, %v99
    %v101 = vrot.slane %v84, %v100
    %v114 = vunpack.c.l.b16 %v44
    %v115 = vunpack.c.l.b16 %v45
    %v116 = vunpack.c.l.b16 %v46
    %v117 = vunpack.c.l.b16 %v47
    %v118 = vunpack.c.l.b16 %v48
    %v119 = vunpack.c.l.b16 %v49
    %v120 = vunpack.c.l.b16 %v50
    %v121 = vunpack.c.l.b16 %v51
    %v122 = vpack.c.b16 %v115, %v114
    %v123 = vpack.c.b16 %v117, %v116
    %v124 = vpack.c.b16 %v119, %v118
    %v125 = vpack.c.b16 %v121, %v120
    %v162 = vunpack.c.l.b16 %v52
    %v163 = vunpack.c.h.b16 %v52
    %v164 = vunpack.c.l.b16 %v53
    %v165 = vunpack.c.h.b16 %v53
    %v166 = vunpack.c.l.b16 %v54
    %v167 = vunpack.c.h.b16 %v54
    %v168 = vunpack.c.l.b16 %v55
    %v169 = vunpack.c.h.b16 %v55
    %v170 = vunpack.c.l.b16 %v56
    %v171 = vunpack.c.h.b16 %v56
    %v172 = vunpack.c.l.b16 %v57
    %v173 = vunpack.c.h.b16 %v57
    %v174 = vunpack.c.l.b16 %v58
    %v175 = vunpack.c.h.b16 %v58
    %v176 = vunpack.c.l.b16 %v59
    %v177 = vunpack.c.h.b16 %v59
    %v178 = vunpack.c.l.b16 %v60
    %v179 = vunpack.c.h.b16 %v60
    %v180 = vunpack.c.l.b16 %v61
    %v181 = vunpack.c.h.b16 %v61
    %v182 = vunpack.c.l.b16 %v62
    %v183 = vunpack.c.h.b16 %v62
    %v184 = vunpack.c.l.b16 %v63
    %v185 = vunpack.c.h.b16 %v63
    %v186 = vunpack.c.l.b16 %v64
    %v187 = vunpack.c.h.b16 %v64
    %v188 = vunpack.c.l.b16 %v65
    %v189 = vunpack.c.h.b16 %v65
    %v190 = vunpack.c.l.b16 %v66
    %v191 = vunpack.c.h.b16 %v66
    %v192 = vunpack.c.l.b16 %v67
    %v193 = vunpack.c.h.b16 %v67
    %v194 = vunpack.c.l.b16 %v68
    %v195 = vunpack.c.h.b16 %v68
    %v196 = vunpack.c.l.b16 %v69
    %v197 = vunpack.c.h.b16 %v69
    %v198 = vunpack.c.l.b16 %v70
    %v199 = vunpack.c.h.b16 %v70
    %v200 = vunpack.c.l.b16 %v71
    %v201 = vunpack.c.h.b16 %v71
    %v202 = vunpack.c.l.b16 %v72
    %v203 = vunpack.c.h.b16 %v72
    %v204 = vunpack.c.l.b16 %v73
    %v205 = vunpack.c.h.b16 %v73
    %v206 = vunpack.c.l.b16 %v74
    %v207 = vunpack.c.h.b16 %v74
    %v208 = vunpack.c.l.b16 %v75
    %v209 = vunpack.c.h.b16 %v75
    %v210 = vunpack.c.l.b16 %v76
    %v211 = vunpack.c.h.b16 %v76
    %v212 = vunpack.c.l.b16 %v77
    %v213 = vunpack.c.h.b16 %v77
    %v214 = vunpack.c.l.b16 %v78
    %v215 = vunpack.c.h.b16 %v78
    %v216 = vunpack.c.l.b16 %v79
    %v217 = vunpack.c.h.b16 %v79
    %v218 = vunpack.c.l.b16 %v80
    %v219 = vunpack.c.h.b16 %v80
    %v220 = vunpack.c.l.b16 %v81
    %v221 = vunpack.c.h.b16 %v81
    %v222 = vunpack.c.l.b16 %v82
    %v223 = vunpack.c.h.b16 %v82
    %v224 = vunpack.c.l.b16 %v83
    %v225 = vunpack.c.h.b16 %v83
    %v226 = vpack.c.b16 %v166, %v162
    %v227 = vpack.c.b16 %v167, %v163
    %v228 = vpack.c.b16 %v168, %v164
    %v229 = vpack.c.b16 %v169, %v165
    %v230 = vpack.c.b16 %v174, %v170
    %v231 = vpack.c.b16 %v175, %v171
    %v232 = vpack.c.b16 %v176, %v172
    %v233 = vpack.c.b16 %v177, %v173
    %v234 = vpack.c.b16 %v182, %v178
    %v235 = vpack.c.b16 %v183, %v179
    %v236 = vpack.c.b16 %v184, %v180
    %v237 = vpack.c.b16 %v185, %v181
    %v238 = vpack.c.b16 %v190, %v186
    %v239 = vpack.c.b16 %v191, %v187
    %v240 = vpack.c.b16 %v192, %v188
    %v241 = vpack.c.b16 %v193, %v189
    %v242 = vpack.c.b16 %v198, %v194
    %v243 = vpack.c.b16 %v199, %v195
    %v244 = vpack.c.b16 %v200, %v196
    %v245 = vpack.c.b16 %v201, %v197
    %v246 = vpack.c.b16 %v206, %v202
    %v247 = vpack.c.b16 %v207, %v203
    %v248 = vpack.c.b16 %v208, %v204
    %v249 = vpack.c.b16 %v209, %v205
    %v250 = vpack.c.b16 %v214, %v210
    %v251 = vpack.c.b16 %v215, %v211
    %v252 = vpack.c.b16 %v216, %v212
    %v253 = vpack.c.b16 %v217, %v213
    %v254 = vpack.c.b16 %v222, %v218
    %v255 = vpack.c.b16 %v223, %v219
    %v256 = vpack.c.b16 %v224, %v220
    %v257 = vpack.c.b16 %v225, %v221
    %290 = vmatprep.subr.bf16.mxu0 %v227
    %291 = vmatpush1.bf16.msra.mxu0 %v226
    %292 = vmatprep.subr.bf16.mxu0 %v231
    %293 = vmatpush1.bf16.msra.mxu0 %v230
    %294 = vmatprep.subr.bf16.mxu0 %v235
    %295 = vmatpush1.bf16.msra.mxu0 %v234
    %296 = vmatprep.subr.bf16.mxu0 %v239
    %297 = vmatpush1.bf16.msra.mxu0 %v238
    %298 = vmatprep.subr.bf16.mxu0 %v243
    %299 = vmatpush1.bf16.msra.mxu0 %v242
    %300 = vmatprep.subr.bf16.mxu0 %v247
    %301 = vmatpush1.bf16.msra.mxu0 %v246
    %302 = vmatprep.subr.bf16.mxu0 %v251
    %303 = vmatpush1.bf16.msra.mxu0 %v250
    %304 = vmatprep.subr.bf16.mxu0 %v255
    %305 = vmatpush1.bf16.msra.mxu0 %v254
    %306 = vmatprep.subr.bf16.mxu0 0
    %307 = vmatpush1.bf16.msra.mxu0 0
    %308 = vmatprep.subr.bf16.mxu0 0
    %309 = vmatpush1.bf16.msra.mxu0 0
    %310 = vmatprep.subr.bf16.mxu0 0
    %311 = vmatpush1.bf16.msra.mxu0 0
    %312 = vmatprep.subr.bf16.mxu0 0
    %313 = vmatpush1.bf16.msra.mxu0 0
    %314 = vmatprep.subr.bf16.mxu0 0
    %315 = vmatpush1.bf16.msra.mxu0 0
    %316 = vmatprep.subr.bf16.mxu0 0
    %317 = vmatpush1.bf16.msra.mxu0 0
    %318 = vmatprep.subr.bf16.mxu0 0
    %319 = vmatpush1.bf16.msra.mxu0 0
    %320 = vmatprep.subr.bf16.mxu0 0
    %321 = vmatpush1.bf16.msra.mxu0 0
    %322 = vmatprep.mubr.bf16.mxu0 0
    %323 = vmatmul.mubr.bf16.gmra.mrb[0].mxu0 %v122
    %v324 = vpop.f32.mrb[0].mxu0
    %v325 = vadd.f32 %v89, %v324
    %v326 = vpop.f32.mrb[0].mxu0
    %v327 = vadd.f32 %v93, %v326
    %v328 = vpop.f32.mrb[0].mxu0
    %v329 = vadd.f32 %v89, %v328
    %v330 = vpop.f32.mrb[0].mxu0
    %v331 = vadd.f32 %v93, %v330
    %332 = vmatprep.mubr.bf16.mxu0 0
    %333 = vmatmul.mubr.bf16.gmra.mrb[0].mxu0 %v123
    %v334 = vpop.f32.mrb[0].mxu0
    %v335 = vadd.f32 %v89, %v334
    %v336 = vpop.f32.mrb[0].mxu0
    %v337 = vadd.f32 %v93, %v336
    %v338 = vpop.f32.mrb[0].mxu0
    %v339 = vadd.f32 %v89, %v338
    %v340 = vpop.f32.mrb[0].mxu0
    %v341 = vadd.f32 %v93, %v340
    %342 = vmatprep.mubr.bf16.mxu0 0
    %343 = vmatmul.mubr.bf16.gmra.mrb[0].mxu0 %v124
    %v344 = vpop.f32.mrb[0].mxu0
    %v345 = vadd.f32 %v89, %v344
    %v346 = vpop.f32.mrb[0].mxu0
    %v347 = vadd.f32 %v93, %v346
    %v348 = vpop.f32.mrb[0].mxu0
    %v349 = vadd.f32 %v89, %v348
    %v350 = vpop.f32.mrb[0].mxu0
    %v351 = vadd.f32 %v93, %v350
    %352 = vmatprep.mubr.bf16.mxu0 0
    %353 = vmatmul.mubr.bf16.gmra.mrb[0].mxu0 %v125
    %v354 = vpop.f32.mrb[0].mxu0
    %v355 = vadd.f32 %v89, %v354
    %v356 = vpop.f32.mrb[0].mxu0
    %v357 = vadd.f32 %v93, %v356
    %v358 = vpop.f32.mrb[0].mxu0
    %v359 = vadd.f32 %v89, %v358
    %v360 = vpop.f32.mrb[0].mxu0
    %v361 = vadd.f32 %v93, %v360
    %362 = vdwg.mxu0
    %363 = vmatprep.subr.bf16.mxu0 %v229
    %364 = vmatpush1.bf16.msra.mxu0 %v228
    %365 = vmatprep.subr.bf16.mxu0 %v233
    %366 = vmatpush1.bf16.msra.mxu0 %v232
    %367 = vmatprep.subr.bf16.mxu0 %v237
    %368 = vmatpush1.bf16.msra.mxu0 %v236
    %369 = vmatprep.subr.bf16.mxu0 %v241
    %370 = vmatpush1.bf16.msra.mxu0 %v240
    %371 = vmatprep.subr.bf16.mxu0 %v245
    %372 = vmatpush1.bf16.msra.mxu0 %v244
    %373 = vmatprep.subr.bf16.mxu0 %v249
    %374 = vmatpush1.bf16.msra.mxu0 %v248
    %375 = vmatprep.subr.bf16.mxu0 %v253
    %376 = vmatpush1.bf16.msra.mxu0 %v252
    %377 = vmatprep.subr.bf16.mxu0 %v257
    %378 = vmatpush1.bf16.msra.mxu0 %v256
    %379 = vmatprep.subr.bf16.mxu0 0
    %380 = vmatpush1.bf16.msra.mxu0 0
    %381 = vmatprep.subr.bf16.mxu0 0
    %382 = vmatpush1.bf16.msra.mxu0 0
    %383 = vmatprep.subr.bf16.mxu0 0
    %384 = vmatpush1.bf16.msra.mxu0 0
    %385 = vmatprep.subr.bf16.mxu0 0
    %386 = vmatpush1.bf16.msra.mxu0 0
    %387 = vmatprep.subr.bf16.mxu0 0
    %388 = vmatpush1.bf16.msra.mxu0 0
    %389 = vmatprep.subr.bf16.mxu0 0
    %390 = vmatpush1.bf16.msra.mxu0 0
    %391 = vmatprep.subr.bf16.mxu0 0
    %392 = vmatpush1.bf16.msra.mxu0 0
    %393 = vmatprep.subr.bf16.mxu0 0
    %394 = vmatpush1.bf16.msra.mxu0 0
    %395 = vmatprep.mubr.bf16.mxu0 0
    %396 = vmatmul.mubr.bf16.gmra.mrb[0].mxu0 %v122
    %v397 = vpop.f32.mrb[0].mxu0
    %v398 = vadd.f32 %v97, %v397
    %v399 = vpop.f32.mrb[0].mxu0
    %v400 = vadd.f32 %v101, %v399
    %v401 = vpop.f32.mrb[0].mxu0
    %v402 = vadd.f32 %v97, %v401
    %v403 = vpop.f32.mrb[0].mxu0
    %v404 = vadd.f32 %v101, %v403
    %405 = vmatprep.mubr.bf16.mxu0 0
    %406 = vmatmul.mubr.bf16.gmra.mrb[0].mxu0 %v123
    %v407 = vpop.f32.mrb[0].mxu0
    %v408 = vadd.f32 %v97, %v407
    %v409 = vpop.f32.mrb[0].mxu0
    %v410 = vadd.f32 %v101, %v409
    %v411 = vpop.f32.mrb[0].mxu0
    %v412 = vadd.f32 %v97, %v411
    %v413 = vpop.f32.mrb[0].mxu0
    %v414 = vadd.f32 %v101, %v413
    %415 = vmatprep.mubr.bf16.mxu0 0
    %416 = vmatmul.mubr.bf16.gmra.mrb[0].mxu0 %v124
    %v417 = vpop.f32.mrb[0].mxu0
    %v418 = vadd.f32 %v97, %v417
    %v419 = vpop.f32.mrb[0].mxu0
    %v420 = vadd.f32 %v101, %v419
    %v421 = vpop.f32.mrb[0].mxu0
    %v422 = vadd.f32 %v97, %v421
    %v423 = vpop.f32.mrb[0].mxu0
    %v424 = vadd.f32 %v101, %v423
    %425 = vmatprep.mubr.bf16.mxu0 0
    %426 = vmatmul.mubr.bf16.gmra.mrb[0].mxu0 %v125
    %v427 = vpop.f32.mrb[0].mxu0
    %v428 = vadd.f32 %v97, %v427
    %v429 = vpop.f32.mrb[0].mxu0
    %v430 = vadd.f32 %v101, %v429
    %v431 = vpop.f32.mrb[0].mxu0
    %v432 = vadd.f32 %v97, %v431
    %v433 = vpop.f32.mrb[0].mxu0
    %v434 = vadd.f32 %v101, %v433
    %435 = vdwg.mxu0
    %v436 = vpack.c.bf16 %v329, %v325
    %v437 = vpack.c.bf16 %v331, %v327
    %v438 = vpack.c.bf16 %v402, %v398
    %v439 = vpack.c.bf16 %v404, %v400
    %v440 = vpack.c.bf16 %v339, %v335
    %v441 = vpack.c.bf16 %v341, %v337
    %v442 = vpack.c.bf16 %v412, %v408
    %v443 = vpack.c.bf16 %v414, %v410
    %v444 = vpack.c.bf16 %v349, %v345
    %v445 = vpack.c.bf16 %v351, %v347
    %v446 = vpack.c.bf16 %v422, %v418
    %v447 = vpack.c.bf16 %v424, %v420
    %v448 = vpack.c.bf16 %v359, %v355
    %v449 = vpack.c.bf16 %v361, %v357
    %v450 = vpack.c.bf16 %v432, %v428
    %v451 = vpack.c.bf16 %v434, %v430
    %v468 = vunpack.c.l.b16 %v436
    %v469 = vunpack.c.l.b16 %v437
    %v470 = vunpack.c.l.b16 %v438
    %v471 = vunpack.c.l.b16 %v439
    %v472 = vunpack.c.h.b16 %v436
    %v473 = vunpack.c.h.b16 %v437
    %v474 = vunpack.c.h.b16 %v438
    %v475 = vunpack.c.h.b16 %v439
    %v476 = vunpack.c.l.b16 %v440
    %v477 = vunpack.c.l.b16 %v441
    %v478 = vunpack.c.l.b16 %v442
    %v479 = vunpack.c.l.b16 %v443
    %v480 = vunpack.c.h.b16 %v440
    %v481 = vunpack.c.h.b16 %v441
    %v482 = vunpack.c.h.b16 %v442
    %v483 = vunpack.c.h.b16 %v443
    %v484 = vunpack.c.l.b16 %v444
    %v485 = vunpack.c.l.b16 %v445
    %v486 = vunpack.c.l.b16 %v446
    %v487 = vunpack.c.l.b16 %v447
    %v488 = vunpack.c.h.b16 %v444
    %v489 = vunpack.c.h.b16 %v445
    %v490 = vunpack.c.h.b16 %v446
    %v491 = vunpack.c.h.b16 %v447
    %v492 = vunpack.c.l.b16 %v448
    %v493 = vunpack.c.l.b16 %v449
    %v494 = vunpack.c.l.b16 %v450
    %v495 = vunpack.c.l.b16 %v451
    %v496 = vunpack.c.h.b16 %v448
    %v497 = vunpack.c.h.b16 %v449
    %v498 = vunpack.c.h.b16 %v450
    %v499 = vunpack.c.h.b16 %v451
    %v500 = vpack.c.b16 %v469, %v468
    %v501 = vpack.c.b16 %v471, %v470
    %v502 = vpack.c.b16 %v473, %v472
    %v503 = vpack.c.b16 %v475, %v474
    %v504 = vpack.c.b16 %v477, %v476
    %v505 = vpack.c.b16 %v479, %v478
    %v506 = vpack.c.b16 %v481, %v480
    %v507 = vpack.c.b16 %v483, %v482
    %v508 = vpack.c.b16 %v485, %v484
    %v509 = vpack.c.b16 %v487, %v486
    %v510 = vpack.c.b16 %v489, %v488
    %v511 = vpack.c.b16 %v491, %v490
    %v512 = vpack.c.b16 %v493, %v492
    %v513 = vpack.c.b16 %v495, %v494
    %v514 = vpack.c.b16 %v497, %v496
    %v515 = vpack.c.b16 %v499, %v498
    %532 = vst [vmem:[#allocation7] sm:$0xff] %v500
    %533 = vst [vmem:[#allocation7 + $0x8] sm:$0xff] %v501
    %534 = vst [vmem:[#allocation7 + $0x10] sm:$0xff] %v502
    %535 = vst [vmem:[#allocation7 + $0x18] sm:$0xff] %v503
    %536 = vst [vmem:[#allocation7 + $0x20] sm:$0xff] %v504
    %537 = vst [vmem:[#allocation7 + $0x28] sm:$0xff] %v505
    %538 = vst [vmem:[#allocation7 + $0x30] sm:$0xff] %v506
    %539 = vst [vmem:[#allocation7 + $0x38] sm:$0xff] %v507
    %540 = vst [vmem:[#allocation7 + $0x40] sm:$0xff] %v508
    %541 = vst [vmem:[#allocation7 + $0x48] sm:$0xff] %v509
    %542 = vst [vmem:[#allocation7 + $0x50] sm:$0xff] %v510
    %543 = vst [vmem:[#allocation7 + $0x58] sm:$0xff] %v511
    %544 = vst [vmem:[#allocation7 + $0x60] sm:$0xff] %v512
    %545 = vst [vmem:[#allocation7 + $0x68] sm:$0xff] %v513
    %546 = vst [vmem:[#allocation7 + $0x70] sm:$0xff] %v514
    %547 = vst [vmem:[#allocation7 + $0x78] sm:$0xff] %v515
    // Predicated region
    $region22: #{tpu_custom_call.1} parent=1 // pred_check
      _
    $region23: #{tpu_custom_call.1} parent=1 // pred_check_branch
      %549 = sbr.rel (0) target = $region25
    $region24: #{tpu_custom_call.1} parent=1 // pred_region
      %s551 = ssub.s32 2048, 2048
      %552 = vsyncadd [#allocation4], %s551
      %s553 = sshll.u32 [#allocation7], 4
      %s554 = int_to_ptr.vmem [resolvable:$true] %s553
      %559 = dma.vmem_to_hbm [thread:$0]  %s554, 2048, %s3, [#allocation4], 256, 256, 16
    $region25: #{tpu_custom_call.1} parent=1 // pred_fallthru
      _
    // Predicated region
    $region26: #{tpu_custom_call.1} parent=1 // pred_check
      _
    $region27: #{tpu_custom_call.1} parent=1 // pred_check_branch
      %561 = sbr.rel (0) target = $region29
    $region28: #{tpu_custom_call.1} parent=1 // pred_region
      %562 = dma.done [#allocation4], 2048
    $region29: #{tpu_custom_call.1} parent=1 // pred_fallthru
      _
    %563 = vsyncpa [#allocation3], 1
    %564 = vsyncpa [#allocation6], 1
    %565 = vsyncpa [#allocation4], 1

</llo_original>
